<compile_context>
chip_gen: v6e
topology: v6e:2x2x1
jax: 0.10.0
libtpu: 0.0.40
codegen_flags: <defaults>
</compile_context>

<pallas_src>
import jax
import jax.numpy as jnp
from jax.experimental import pallas as pl
from jax.experimental.pallas import tpu as pltpu


STD = 0.05

# Lane-dense slab widths (all multiples of 128 -> unmasked full-width vst).
_LANE_CHOICES = (512, 256, 128)
# Target ~2 MiB f32 per tile; in+out double-buffered ~= 8 MiB VMEM.
_TILE_BYTES = 2 * 1024 * 1024


def _pick_lanes(total: int):
    """Largest lane width dividing `total`, preferring one with rows >= 16
    (so the row grid can split into >= 2 blocks for the v7x core split).
    Returns None if total is not a multiple of 128 (truly ragged)."""
    best = None
    for lanes in _LANE_CHOICES:
        if total % lanes == 0:
            if best is None:
                best = lanes
            if total // lanes >= 16:
                return lanes
    return best


def _pick_block_rows(rows: int, lanes: int) -> int:
    """Row tiling: ~2 MiB tiles, and >= 2 blocks whenever rows > 8 so the
    'parallel' grid axis can be sharded across v7x's two TensorCores."""
    if rows <= 8:
        return rows  # full-extent block (always legal)
    max_rows = max(8, (_TILE_BYTES // (lanes * 4)) // 8 * 8)
    half = -(-rows // 2)          # aim for at least two blocks
    half = -(-half // 8) * 8      # round up to sublane multiple of 8
    return max(8, min(max_rows, half))


def _gaussian_noise_tpu_kernel(seed_ref, x_ref, o_ref):
    """TPU path: on-chip hardware PRNG, one tile per grid step."""
    # Distinct PRNG stream per grid step (and per TensorCore under "parallel").
    pltpu.prng_seed(seed_ref[0], pl.program_id(0))
    noise = pltpu.stateful_normal(x_ref.shape, jnp.float32)
    # Add in f32, cast the *sum* (not the noise) to the output dtype.
    o_ref[...] = (x_ref[...].astype(jnp.float32) + STD * noise).astype(o_ref.dtype)


def _add_scaled_noise_kernel(x_ref, n_ref, o_ref):
    """Portable fallback path: noise tile streamed in from HBM, fused add."""
    o_ref[...] = (
        x_ref[...].astype(jnp.float32) + STD * n_ref[...].astype(jnp.float32)
    ).astype(o_ref.dtype)


def _noise_add_slab(x2: jax.Array, seed: int, on_tpu: bool) -> jax.Array:
    """x2: (rows, lanes) lane-dense slab.  Returns x2 + N(0, STD^2)."""
    rows, lanes = x2.shape
    block_rows = _pick_block_rows(rows, lanes)
    n_blocks = pl.cdiv(rows, block_rows)  # partial last block handled by Pallas

    if on_tpu:
        seed_arr = jnp.asarray([seed], dtype=jnp.int32)
        return pl.pallas_call(
            _gaussian_noise_tpu_kernel,
            out_shape=jax.ShapeDtypeStruct((rows, lanes), x2.dtype),
            grid_spec=pltpu.PrefetchScalarGridSpec(
                num_scalar_prefetch=1,
                grid=(n_blocks,),
                in_specs=[
                    pl.BlockSpec((block_rows, lanes), lambda i, seed_ref: (i, 0)),
                ],
                out_specs=pl.BlockSpec((block_rows, lanes), lambda i, seed_ref: (i, 0)),
            ),
            # arg 0 is the scalar-prefetch seed, arg 1 is the x slab.
            input_output_aliases={1: 0},
            compiler_params=pltpu.CompilerParams(
                dimension_semantics=("parallel",),  # megacore splits row tiles
                has_side_effects=True,              # PRNG state mutation
            ),
        )(seed_arr, x2)

    # Fallback for CPU / interpret backends (hardware PRNG has no lowering
    # there): stream precomputed jax.random noise through the same tiled
    # pipeline and fuse the scaled add.
    noise2 = jax.random.normal(jax.random.PRNGKey(seed), (rows, lanes), jnp.float32)
    spec = pl.BlockSpec((block_rows, lanes), lambda i: (i, 0))
    return pl.pallas_call(
        _add_scaled_noise_kernel,
        out_shape=jax.ShapeDtypeStruct((rows, lanes), x2.dtype),
        grid=(n_blocks,),
        in_specs=[spec, spec],
        out_specs=spec,
        compiler_params=pltpu.CompilerParams(dimension_semantics=("parallel",)),
    )(x2, noise2)


def gaussian_noise(x: jax.Array, seed: int) -> jax.Array:
    """x: (N, C, H, W).  Returns x + N(0, STD^2) noise of the same shape.

    Supply a fresh `seed` on every call to redraw the noise (matching the
    PyTorch module, which redraws on every forward).
    """
    orig_shape = x.shape
    total = x.size
    on_tpu = jax.default_backend() == "tpu"  # evaluated at call time

    flat = x.reshape(-1)
    lanes = _pick_lanes(total)

    if lanes is not None:
        # Aligned path (total % 128 == 0): zero-copy reshape to a lane-dense
        # slab, no pad, no slice; the I/O alias targets the caller's buffer.
        out2 = _noise_add_slab(flat.reshape(total // lanes, lanes), seed, on_tpu)
        return out2.reshape(orig_shape)

    # Ragged path (total not a multiple of 128): kernel the aligned head and
    # handle the (< 512-element) tail with plain JAX, then stitch.  This is
    # one extra pass (the concatenate) instead of the two full pad+slice
    # passes of the old version.  Tail noise comes from jax.random but is
    # still N(0, STD^2), matching the module's semantics.
    lanes = _LANE_CHOICES[0]
    head_len = (total // lanes) * lanes
    tail = flat[head_len:]
    tail_noise = STD * jax.random.normal(
        jax.random.fold_in(jax.random.PRNGKey(seed), 1), tail.shape, jnp.float32
    )
    tail_out = (tail.astype(jnp.float32) + tail_noise).astype(x.dtype)
    if head_len == 0:
        return tail_out.reshape(orig_shape)
    head2 = _noise_add_slab(
        flat[:head_len].reshape(head_len // lanes, lanes), seed, on_tpu
    )
    return jnp.concatenate([head2.reshape(-1), tail_out]).reshape(orig_shape)


if __name__ == "__main__":
    key = jax.random.PRNGKey(0)
    # Small shapes consistent with the module: batch=2, input_shape=(4, 16, 16)
    x = jax.random.normal(key, (2, 4, 16, 16), dtype=jnp.float32)

    out = jax.block_until_ready(gaussian_noise(x, seed=1234))

    # Sanity checks: shape/dtype preserved; added noise is small, ~zero mean,
    # and has roughly the requested std.
    assert out.shape == x.shape and out.dtype == x.dtype
    noise = out - x
    assert float(jnp.max(jnp.abs(noise))) < 1.0
    assert float(jnp.abs(jnp.mean(noise))) < 0.05
    std = float(jnp.std(noise))
    assert 0.03 < std < 0.07, std

    # A different seed must give a different draw (fresh noise per call).
    out_b = jax.block_until_ready(gaussian_noise(x, seed=4321))
    assert float(jnp.max(jnp.abs(out_b - out))) > 0.0

    # TODO(synk): the PyTorch try/except fallback (re-allocating noise of shape
    # (N, 1, image_size, image_size) on a runtime shape mismatch) is dynamic
    # error recovery with no static-shape Pallas equivalent; only the primary
    # path is implemented.

    print("KERNEL_OK")
</pallas_src>

<mosaic_0001>
module attributes {stable_mosaic.version = 11 : i64} {
  func.func @_add_scaled_noise_kernel(%arg0: i32, %arg1: memref<8x128xf32, #tpu.memory_space<vmem>>, %arg2: memref<8x128xf32, #tpu.memory_space<vmem>>, %arg3: memref<8x128xf32, #tpu.memory_space<vmem>>) attributes {dimension_semantics = [#tpu.dimension_semantics<parallel>], iteration_bounds = array<i64: 2>, scalar_prefetch = 0 : i64, scratch_operands = 0 : i64, tpu.core_type = #tpu.core_type<tc>, window_params = [{transform_indices = @transform_0, window_bounds = array<i64: 8, 128>}, {transform_indices = @transform_1, window_bounds = array<i64: 8, 128>}, {transform_indices = @transform_2, window_bounds = array<i64: 8, 128>}]} {
    %c0 = arith.constant 0 : index
    %c0_0 = arith.constant 0 : index
    %0 = vector.load %arg1[%c0, %c0_0] : memref<8x128xf32, #tpu.memory_space<vmem>>, vector<8x128xf32>
    %c0_1 = arith.constant 0 : index
    %c0_2 = arith.constant 0 : index
    %1 = vector.load %arg2[%c0_1, %c0_2] : memref<8x128xf32, #tpu.memory_space<vmem>>, vector<8x128xf32>
    %cst = arith.constant 5.000000e-02 : f32
    %2 = vector.broadcast %cst : f32 to vector<8x128xf32>
    %3 = arith.mulf %2, %1 : vector<8x128xf32>
    %4 = arith.addf %0, %3 : vector<8x128xf32>
    %c0_3 = arith.constant 0 : index
    %c0_4 = arith.constant 0 : index
    %5 = vector.load %arg3[%c0_3, %c0_4] : memref<8x128xf32, #tpu.memory_space<vmem>>, vector<8x128xf32>
    tpu.vector_store %arg3[%c0_3, %c0_4], %4 {strides = array<i32>} : memref<8x128xf32, #tpu.memory_space<vmem>>, vector<8x128xf32>,
    return
  }
  func.func @transform_0(%arg0: i32) -> (i32, i32) {
    %c0_i32 = arith.constant 0 : i32
    %c0_i32_0 = arith.constant 0 : i32
    return %arg0, %c0_i32 : i32, i32
  }
  func.func @transform_1(%arg0: i32) -> (i32, i32) {
    %c0_i32 = arith.constant 0 : i32
    %c0_i32_0 = arith.constant 0 : i32
    return %arg0, %c0_i32 : i32, i32
  }
  func.func @transform_2(%arg0: i32) -> (i32, i32) {
    %c0_i32 = arith.constant 0 : i32
    %c0_i32_0 = arith.constant 0 : i32
    return %arg0, %c0_i32 : i32, i32
  }
}

</mosaic_0001>

<llo_original>
// kernel: tpu_custom_call.1
$region0: #{tpu_custom_call.1}
  #allocation0 [shape = 'u32[]', space=smem, size = 0x4, offset = 0x4, fixed_abs, tag = 'smem constant byte address 0x4 - core index']
  #allocation1 [shape = 'u32[144,128]{1,0:T(1,128)}', space=vmem, size = 0x12000, scoped, tag = 'internal scratch']
  %s0 = inlined_call_operand.hbm [shape: f32[16,128], index: 0, kind: input, shape index: {}]
  %s1 = inlined_call_operand.hbm [shape: f32[16,128], index: 1, kind: input, shape index: {}]
  %s2 = inlined_call_operand.hbm [shape: f32[16,128], index: 2, kind: output, shape index: {}]
  %s3 = sld [smem:[#allocation0]]
  $region49: #{tpu_custom_call.1} parent=0
    _
  %s5 = ssub.s32 1, %s3
  %s6 = scalar_select 0, %s5, %s3
  $region1: #{tpu_custom_call.1} parent=0
    #allocation2 [shape = 'u8[8192]{0}', space=vmem, size = 0x2000, scoped, tag = 'input window, operand 0']
    #allocation3 [shape = 's32[2]{0}', space=sflag, size = 0x8, scoped, tag = 'scoped memory for tpu_custom_call.1']
    #allocation4 [shape = 's32[2]{0}', space=sflag, size = 0x8, scoped, tag = 'scoped memory for tpu_custom_call.1']
    #allocation5 [shape = 'u8[8192]{0}', space=vmem, size = 0x2000, scoped, tag = 'input window, operand 1']
    #allocation6 [shape = 's32[2]{0}', space=sflag, size = 0x8, scoped, tag = 'scoped memory for tpu_custom_call.1']
    #allocation7 [shape = 'u8[8192]{0}', space=vmem, size = 0x2000, scoped, tag = 'output window, operand 0']
    %7 = vsyncpa [#allocation3], 0
    %s8 = scalar_lea.sflag [#allocation3], 1
    %9 = vsyncpa %s8, 0
    %10 = vsyncpa [#allocation6], 0
    %s11 = scalar_lea.sflag [#allocation6], 1
    %12 = vsyncpa %s11, 0
    %13 = vsyncpa [#allocation4], 0
    %s14 = scalar_lea.sflag [#allocation4], 1
    %15 = vsyncpa %s14, 0
    loop: start=0, step=1, limit=4
    $region2: #{tpu_custom_call.1} parent=1 // loop_pre_header
      _
    $region3: #{tpu_custom_call.1} parent=1 // loop_header
      %s17 = sphi 0, %s21
      %p18 = scmp.ge.s32.totalorder %s17, 4
      %s27 = sphi 0, %s29
      %s30 = sphi 0, %s27
      %s31 = sphi 0, %s30
      %s47 = sphi 0, %s31
      %s53 = sphi 0, %s55
      %s56 = sphi 0, %s53
      %s57 = sphi 0, %s56
      %s73 = sphi 0, %s57
      %s79 = sphi 0, %s81
      %s82 = sphi 0, %s79
      %s83 = sphi 0, %s82
      %s99 = sphi 0, %s83
    $region4: #{tpu_custom_call.1} parent=1 // loop_header_branch
      %20 = sbr.rel (%p18) target = $region8
    $region5: #{tpu_custom_call.1} parent=1 // loop_body
      %s22 = ssub.s32 %s17, 1
      %s23 = ssub.s32 %s17, 2
      %s24 = sadd.s32 %s17, 1
      %s25 = ssub.s32 %s17, %s24
      %p26 = scmp.eq.s32.totalorder %s25, 0
      %s28 = sadd.s32 %s27, 1
      %s29 = scalar_select %p26, %s27, %s28
      %p32 = pneg %p26
      %p33 = scmp.eq.s32.totalorder %s17, 1
      %p34 = por %p32, %p33
      %p35 = scmp.ne.s32.totalorder %s27, %s30
      %p36 = scmp.eq.s32.totalorder %s17, 0
      %p37 = por %p35, %p36
      %p38 = scmp.ne.s32.totalorder %s27, %s30
      %p39 = scmp.eq.s32.totalorder %s22, 1
      %p40 = por %p38, %p39
      %p41 = scmp.ne.s32.totalorder %s30, %s31
      %p42 = scmp.eq.s32.totalorder %s22, 0
      %p43 = por %p41, %p42
      %p44 = scmp.ne.s32.totalorder %s30, %s31
      %p45 = scmp.eq.s32.totalorder %s23, 1
      %p46 = por %p44, %p45
      %p48 = scmp.ne.s32.totalorder %s31, %s47
      %p49 = scmp.eq.s32.totalorder %s23, 0
      %p50 = por %p48, %p49
      %s51 = ssub.s32 %s17, %s24
      %p52 = scmp.eq.s32.totalorder %s51, 0
      %s54 = sadd.s32 %s53, 1
      %s55 = scalar_select %p52, %s53, %s54
      %p58 = pneg %p52
      %p59 = scmp.eq.s32.totalorder %s17, 1
      %p60 = por %p58, %p59
      %p61 = scmp.ne.s32.totalorder %s53, %s56
      %p62 = scmp.eq.s32.totalorder %s17, 0
      %p63 = por %p61, %p62
      %p64 = scmp.ne.s32.totalorder %s53, %s56
      %p65 = scmp.eq.s32.totalorder %s22, 1
      %p66 = por %p64, %p65
      %p67 = scmp.ne.s32.totalorder %s56, %s57
      %p68 = scmp.eq.s32.totalorder %s22, 0
      %p69 = por %p67, %p68
      %p70 = scmp.ne.s32.totalorder %s56, %s57
      %p71 = scmp.eq.s32.totalorder %s23, 1
      %p72 = por %p70, %p71
      %p74 = scmp.ne.s32.totalorder %s57, %s73
      %p75 = scmp.eq.s32.totalorder %s23, 0
      %p76 = por %p74, %p75
      %s77 = ssub.s32 %s17, %s24
      %p78 = scmp.eq.s32.totalorder %s77, 0
      %s80 = sadd.s32 %s79, 1
      %s81 = scalar_select %p78, %s79, %s80
      %p84 = pneg %p78
      %p85 = scmp.eq.s32.totalorder %s17, 1
      %p86 = por %p84, %p85
      %p87 = scmp.ne.s32.totalorder %s79, %s82
      %p88 = scmp.eq.s32.totalorder %s17, 0
      %p89 = por %p87, %p88
      %p90 = scmp.ne.s32.totalorder %s79, %s82
      %p91 = scmp.eq.s32.totalorder %s22, 1
      %p92 = por %p90, %p91
      %p93 = scmp.ne.s32.totalorder %s82, %s83
      %p94 = scmp.eq.s32.totalorder %s22, 0
      %p95 = por %p93, %p94
      %p96 = scmp.ne.s32.totalorder %s82, %s83
      %p97 = scmp.eq.s32.totalorder %s23, 1
      %p98 = por %p96, %p97
      %p100 = scmp.ne.s32.totalorder %s83, %s99
      %p101 = scmp.eq.s32.totalorder %s23, 0
      %p102 = por %p100, %p101
      %p103 = scmp.le.s32.totalorder 1, %s17
      %p104 = scmp.lt.s32.totalorder %s17, 3
      %p105 = pnand %p103, %p104
      %p106 = pneg %p105
      // Predicated region
      $region9: #{tpu_custom_call.1} parent=5 // pred_check
        _
      $region10: #{tpu_custom_call.1} parent=5 // pred_check_branch
        %108 = sbr.rel (%p105) target = $region12
      $region11: #{tpu_custom_call.1} parent=5 // pred_region
        %s109 = ssub.s32 %s17, 1
      $region12: #{tpu_custom_call.1} parent=5 // pred_fallthru
        _
      %p110 = scmp.lt.s32.totalorder %s17, 2
      // Predicated region
      $region13: #{tpu_custom_call.1} parent=5 // pred_check
        %p111 = pneg %p110
      $region14: #{tpu_custom_call.1} parent=5 // pred_check_branch
        %113 = sbr.rel (%p111) target = $region16
      $region15: #{tpu_custom_call.1} parent=5 // pred_region
        // Predicated region
        $region17: #{tpu_custom_call.1} parent=15 // pred_check
          %p114 = pneg %p37
        $region18: #{tpu_custom_call.1} parent=15 // pred_check_branch
          %116 = sbr.rel (%p114) target = $region20
        $region19: #{tpu_custom_call.1} parent=15 // pred_region
          %s117 = sand.u32 %s27, 1
          %s118 = scalar_lea.sflag [#allocation3], %s117
          %s119 = sand.u32 %s27, 1
          %s120 = smul.addr %s119, 8
          %s121 = scalar_lea.vmem [#allocation2], %s120
          %s123 = ssub.s32 128, 128
          %124 = vsyncadd %s118, %s123
          %s125 = smul.addr %s17, 128
          %s126 = scalar_lea.hbm %s0, %s125
          %s128 = sshll.u32 %s121, 4
          %s129 = int_to_ptr.vmem [resolvable:$true] %s128
          %131 = dma.hbm_to_vmem [thread:$0]  %s126, 128, %s129, %s118
        $region20: #{tpu_custom_call.1} parent=15 // pred_fallthru
          _
        // Predicated region
        $region21: #{tpu_custom_call.1} parent=15 // pred_check
          %p132 = pneg %p63
        $region22: #{tpu_custom_call.1} parent=15 // pred_check_branch
          %134 = sbr.rel (%p132) target = $region24
        $region23: #{tpu_custom_call.1} parent=15 // pred_region
          %s135 = sand.u32 %s53, 1
          %s136 = scalar_lea.sflag [#allocation6], %s135
          %s137 = sand.u32 %s53, 1
          %s138 = smul.addr %s137, 8
          %s139 = scalar_lea.vmem [#allocation5], %s138
          %s141 = ssub.s32 128, 128
          %142 = vsyncadd %s136, %s141
          %s143 = smul.addr %s17, 128
          %s144 = scalar_lea.hbm %s1, %s143
          %s146 = sshll.u32 %s139, 4
          %s147 = int_to_ptr.vmem [resolvable:$true] %s146
          %149 = dma.hbm_to_vmem [thread:$0]  %s144, 128, %s147, %s136
        $region24: #{tpu_custom_call.1} parent=15 // pred_fallthru
          _
      $region16: #{tpu_custom_call.1} parent=5 // pred_fallthru
        _
      %p150 = scmp.le.s32.totalorder 1, %s17
      %p151 = scmp.lt.s32.totalorder %s17, 3
      %p152 = pnand %p150, %p151
      %p153 = pneg %p152
      // Predicated region
      $region25: #{tpu_custom_call.1} parent=5 // pred_check
        _
      $region26: #{tpu_custom_call.1} parent=5 // pred_check_branch
        %155 = sbr.rel (%p152) target = $region28
      $region27: #{tpu_custom_call.1} parent=5 // pred_region
        %s156 = ssub.s32 %s17, 1
        %s157 = sand.u32 %s30, 1
        %s158 = scalar_lea.sflag [#allocation3], %s157
        %s159 = sand.u32 %s30, 1
        %s160 = smul.addr %s159, 8
        %s161 = scalar_lea.vmem [#allocation2], %s160
        // Predicated region
        $region29: #{tpu_custom_call.1} parent=27 // pred_check
          %p162 = pneg %p43
        $region30: #{tpu_custom_call.1} parent=27 // pred_check_branch
          %164 = sbr.rel (%p162) target = $region32
        $region31: #{tpu_custom_call.1} parent=27 // pred_region
          %165 = dma.done %s158, 128
        $region32: #{tpu_custom_call.1} parent=27 // pred_fallthru
          _
        %s166 = sand.u32 %s56, 1
        %s167 = scalar_lea.sflag [#allocation6], %s166
        %s168 = sand.u32 %s56, 1
        %s169 = smul.addr %s168, 8
        %s170 = scalar_lea.vmem [#allocation5], %s169
        // Predicated region
        $region33: #{tpu_custom_call.1} parent=27 // pred_check
          %p171 = pneg %p69
        $region34: #{tpu_custom_call.1} parent=27 // pred_check_branch
          %173 = sbr.rel (%p171) target = $region36
        $region35: #{tpu_custom_call.1} parent=27 // pred_region
          %174 = dma.done %s167, 128
        $region36: #{tpu_custom_call.1} parent=27 // pred_fallthru
          _
        %s175 = sand.u32 %s30, 1
        %s176 = scalar_lea.sflag [#allocation3], %s175
        %s177 = sand.u32 %s30, 1
        %s178 = smul.addr %s177, 8
        %s179 = scalar_lea.vmem [#allocation2], %s178
        %p180 = pneg %p43
        %p181 = pneg %p40
        %s182 = sand.u32 %s56, 1
        %s183 = scalar_lea.sflag [#allocation6], %s182
        %s184 = sand.u32 %s56, 1
        %s185 = smul.addr %s184, 8
        %s186 = scalar_lea.vmem [#allocation5], %s185
        %p187 = pneg %p69
        %p188 = pneg %p66
        %p189 = pneg %p95
        %p190 = pneg %p92
        %s191 = sand.u32 %s82, 1
        %s192 = scalar_lea.sflag [#allocation4], %s191
        %s193 = sand.u32 %s82, 1
        %s194 = smul.addr %s193, 8
        %s195 = scalar_lea.vmem [#allocation7], %s194
        %v196 = vld [vmem:[%s161] sm:$0xff]
        %v197 = vld [vmem:[%s170] sm:$0xff]
        %v198 = vmul.f32 %v197, 0.05
        %v199 = vadd.f32 %v196, %v198
        %200 = vst [vmem:[%s195] sm:$0xff] %v199
        %s201 = sand.u32 %s82, 1
        %s202 = scalar_lea.sflag [#allocation4], %s201
        %s203 = sand.u32 %s82, 1
        %s204 = smul.addr %s203, 8
        %s205 = scalar_lea.vmem [#allocation7], %s204
        // Predicated region
        $region37: #{tpu_custom_call.1} parent=27 // pred_check
          %p206 = pneg %p92
        $region38: #{tpu_custom_call.1} parent=27 // pred_check_branch
          %208 = sbr.rel (%p206) target = $region40
        $region39: #{tpu_custom_call.1} parent=27 // pred_region
          %s210 = ssub.s32 128, 128
          %211 = vsyncadd %s202, %s210
          %s212 = smul.addr %s22, 128
          %s213 = scalar_lea.hbm %s2, %s212
          %s215 = sshll.u32 %s205, 4
          %s216 = int_to_ptr.vmem [resolvable:$true] %s215
          %218 = dma.vmem_to_hbm [thread:$0]  %s216, 128, %s213, %s202
        $region40: #{tpu_custom_call.1} parent=27 // pred_fallthru
          _
      $region28: #{tpu_custom_call.1} parent=5 // pred_fallthru
        _
      %p219 = scmp.le.s32.totalorder 2, %s17
      // Predicated region
      $region41: #{tpu_custom_call.1} parent=5 // pred_check
        %p220 = pneg %p219
      $region42: #{tpu_custom_call.1} parent=5 // pred_check_branch
        %222 = sbr.rel (%p220) target = $region44
      $region43: #{tpu_custom_call.1} parent=5 // pred_region
        %s223 = ssub.s32 %s17, 2
        // Predicated region
        $region45: #{tpu_custom_call.1} parent=43 // pred_check
          %p224 = pneg %p98
        $region46: #{tpu_custom_call.1} parent=43 // pred_check_branch
          %226 = sbr.rel (%p224) target = $region48
        $region47: #{tpu_custom_call.1} parent=43 // pred_region
          %s227 = sand.u32 %s83, 1
          %s228 = scalar_lea.sflag [#allocation4], %s227
          %s229 = sand.u32 %s83, 1
          %s230 = smul.addr %s229, 8
          %s231 = scalar_lea.vmem [#allocation7], %s230
          %232 = dma.done %s228, 128
        $region48: #{tpu_custom_call.1} parent=43 // pred_fallthru
          _
      $region44: #{tpu_custom_call.1} parent=5 // pred_fallthru
        _
    $region6: #{tpu_custom_call.1} parent=1 // loop_footer
      %s21 = sadd.s32 1, %s17
    $region7: #{tpu_custom_call.1} parent=1 // loop_footer_branch
      %16 = sbr.rel target = $region3
    $region8: #{tpu_custom_call.1} parent=1 // loop_exit
      _
    %233 = vsyncpa [#allocation3], 1
    %s234 = scalar_lea.sflag [#allocation3], 1
    %235 = vsyncpa %s234, 1
    %236 = vsyncpa [#allocation6], 1
    %s237 = scalar_lea.sflag [#allocation6], 1
    %238 = vsyncpa %s237, 1
    %239 = vsyncpa [#allocation4], 1
    %s240 = scalar_lea.sflag [#allocation4], 1
    %241 = vsyncpa %s240, 1

</llo_original>
